<compile_context>
chip_gen: v5e
topology: v5e:2x2
jax: 0.10.0
libtpu: 0.0.40
codegen_flags: <defaults>
</compile_context>

<pallas_src>
import math

import jax
import jax.numpy as jnp
from jax.experimental import pallas as pl
from jax.experimental.pallas import tpu as pltpu


# ----------------------------------------------------------------------------
# Generation-aware sizing
# ----------------------------------------------------------------------------
def _tpu_vmem_bytes():
    try:
        info = pltpu.get_tpu_info()
        for attr in ("vmem_capacity_bytes", "vmem_bytes", "vmem_size_bytes"):
            v = getattr(info, attr, None)
            if v:
                return int(v)
    except Exception:
        pass
    return 64 * 1024 * 1024  # conservative (v7x-sized) fallback


_VMEM_CAP = _tpu_vmem_bytes()
if _VMEM_CAP >= 100 * 1024 * 1024:        # v5e / v6e: 128 MiB physical VMEM
    _MAX_BM = 512
    _VMEM_LIMIT = 96 * 1024 * 1024
else:                                      # v7x: 64 MiB physical VMEM
    _MAX_BM = 256
    _VMEM_LIMIT = 48 * 1024 * 1024


def _round_up(n, m):
    return ((n + m - 1) // m) * m


def _row_tiling(n):
    """Fixed row tile (multiple of 8, capped) + padded row count.
    Keeps the grid length >= 2 when possible so both v7x TensorCores get work."""
    bm = min(_MAX_BM, _round_up(n, 8))
    if n > 8 and _round_up(n, bm) // bm < 2:
        bm = _round_up((n + 1) // 2, 8)
    return bm, _round_up(n, bm)


def _pad_rows(x2, n_pad):
    n = x2.shape[0]
    if n_pad == n:
        return x2
    return jnp.pad(x2, ((0, n_pad - n), (0, 0)))


def _cparams(sem=("parallel",)):
    return pltpu.CompilerParams(dimension_semantics=sem,
                                vmem_limit_bytes=_VMEM_LIMIT)


# ----------------------------------------------------------------------------
# Single-buffered specs for grid-invariant operands (weights / bias / LN params)
# ----------------------------------------------------------------------------
_WEIGHT_PM_RESOLVED = False
_WEIGHT_PM = None


def _weight_pipeline_mode():
    """Probe once whether pipeline_mode=pl.Buffered(1) is supported; fall back
    silently to default (double) buffering otherwise."""
    global _WEIGHT_PM_RESOLVED, _WEIGHT_PM
    if _WEIGHT_PM_RESOLVED:
        return _WEIGHT_PM
    _WEIGHT_PM_RESOLVED = True
    try:
        mode = pl.Buffered(1)

        def _probe_kernel(x_ref, o_ref):
            o_ref[...] = x_ref[...] * 2.0

        probe = pl.pallas_call(
            _probe_kernel,
            out_shape=jax.ShapeDtypeStruct((8, 128), jnp.float32),
            grid=(2,),
            in_specs=[pl.BlockSpec((8, 128), lambda i: (0, 0), pipeline_mode=mode)],
            out_specs=pl.BlockSpec((8, 128), lambda i: (0, 0)),
        )
        res = jax.block_until_ready(probe(jnp.ones((8, 128), jnp.float32)))
        if bool(jnp.all(res == 2.0)):
            _WEIGHT_PM = mode
    except Exception:
        _WEIGHT_PM = None
    return _WEIGHT_PM


def _const_spec(shape):
    """BlockSpec for operands whose block index never changes across the grid."""
    idx = lambda *args: (0,) * len(shape)
    mode = _weight_pipeline_mode()
    if mode is None:
        return pl.BlockSpec(shape, idx)
    return pl.BlockSpec(shape, idx, pipeline_mode=mode)


# ----------------------------------------------------------------------------
# Kernel-side parameter prep (bf16 weights, 1/sqrt(head_dim) folded into qkv)
# ----------------------------------------------------------------------------
def prepare_params(p, planes, head_nums):
    hd = planes // head_nums
    scale = 1.0 / math.sqrt(hd)
    kp = dict(p)
    qkv_w = p["qkv_w"]
    qkv_b = p["qkv_b"]
    kp["qkv_w"] = jnp.concatenate(
        [qkv_w[:, :planes] * scale, qkv_w[:, planes:]], axis=1).astype(jnp.bfloat16)
    kp["qkv_b"] = jnp.concatenate([qkv_b[:planes] * scale, qkv_b[planes:]], axis=0)
    for name in ("proj_w", "attn_proj_w", "mlp_w1", "mlp_w2"):
        if name in kp:
            kp[name] = kp[name].astype(jnp.bfloat16)
    return kp


# ----------------------------------------------------------------------------
# Pallas kernels
# ----------------------------------------------------------------------------
def layernorm_pallas(x, gamma, beta, *, eps=1e-6):
    """Standalone LayerNorm (only used when window padding forbids LN+qkv fusion)."""
    shp = x.shape
    C = shp[-1]
    x2 = x.reshape(-1, C)
    N = x2.shape[0]
    bm, Np = _row_tiling(N)
    x2 = _pad_rows(x2, Np)

    def kern(x_ref, g_ref, b_ref, o_ref):
        xx = x_ref[...].astype(jnp.float32)
        mean = jnp.mean(xx, axis=-1, keepdims=True)
        var = jnp.mean(jnp.square(xx - mean), axis=-1, keepdims=True)
        y = (xx - mean) * jax.lax.rsqrt(var + eps)
        o_ref[...] = (y * g_ref[...] + b_ref[...]).astype(o_ref.dtype)

    out = pl.pallas_call(
        kern,
        out_shape=jax.ShapeDtypeStruct((Np, C), x.dtype),
        grid=(Np // bm,),
        in_specs=[
            pl.BlockSpec((bm, C), lambda i: (i, 0)),
            _const_spec((1, C)),
            _const_spec((1, C)),
        ],
        out_specs=pl.BlockSpec((bm, C), lambda i: (i, 0)),
        compiler_params=_cparams(),
    )(x2, gamma.reshape(1, C), beta.reshape(1, C))
    return out[:N].reshape(shp)


def linear_pallas(x, w, b, *, out_dtype=None):
    """y = x @ w + b ; bf16 MXU operands, f32 accumulation."""
    shp = x.shape
    Cin, Cout = w.shape
    out_dtype = out_dtype or x.dtype
    x2 = x.reshape(-1, Cin)
    N = x2.shape[0]
    bm, Np = _row_tiling(N)
    x2 = _pad_rows(x2, Np)

    def kern(x_ref, w_ref, b_ref, o_ref):
        o = jnp.dot(x_ref[...].astype(jnp.bfloat16),
                    w_ref[...].astype(jnp.bfloat16),
                    preferred_element_type=jnp.float32)
        o_ref[...] = (o + b_ref[...].astype(jnp.float32)).astype(o_ref.dtype)

    out = pl.pallas_call(
        kern,
        out_shape=jax.ShapeDtypeStruct((Np, Cout), out_dtype),
        grid=(Np // bm,),
        in_specs=[
            pl.BlockSpec((bm, Cin), lambda i: (i, 0)),
            _const_spec((Cin, Cout)),
            _const_spec((1, Cout)),
        ],
        out_specs=pl.BlockSpec((bm, Cout), lambda i: (i, 0)),
        compiler_params=_cparams(),
    )(x2, w, b.reshape(1, Cout))
    return out[:N].reshape(shp[:-1] + (Cout,))


def ln_linear_pallas(x, gamma, beta, w, b, *, eps=1e-6, out_dtype=None):
    """Fused LayerNorm + Linear: y = LN(x) @ w + b (LN stats in f32, MXU in bf16)."""
    shp = x.shape
    Cin, Cout = w.shape
    out_dtype = out_dtype or x.dtype
    x2 = x.reshape(-1, Cin)
    N = x2.shape[0]
    bm, Np = _row_tiling(N)
    x2 = _pad_rows(x2, Np)

    def kern(x_ref, g_ref, bn_ref, w_ref, b_ref, o_ref):
        xx = x_ref[...].astype(jnp.float32)
        mean = jnp.mean(xx, axis=-1, keepdims=True)
        var = jnp.mean(jnp.square(xx - mean), axis=-1, keepdims=True)
        xn = (xx - mean) * jax.lax.rsqrt(var + eps)
        xn = xn * g_ref[...] + bn_ref[...]
        o = jnp.dot(xn.astype(jnp.bfloat16), w_ref[...].astype(jnp.bfloat16),
                    preferred_element_type=jnp.float32)
        o_ref[...] = (o + b_ref[...].astype(jnp.float32)).astype(o_ref.dtype)

    out = pl.pallas_call(
        kern,
        out_shape=jax.ShapeDtypeStruct((Np, Cout), out_dtype),
        grid=(Np // bm,),
        in_specs=[
            pl.BlockSpec((bm, Cin), lambda i: (i, 0)),
            _const_spec((1, Cin)),
            _const_spec((1, Cin)),
            _const_spec((Cin, Cout)),
            _const_spec((1, Cout)),
        ],
        out_specs=pl.BlockSpec((bm, Cout), lambda i: (i, 0)),
        compiler_params=_cparams(),
    )(x2, gamma.reshape(1, Cin), beta.reshape(1, Cin), w, b.reshape(1, Cout))
    return out[:N].reshape(shp[:-1] + (Cout,))


def residual_ln_mlp_pallas(res, xa, gamma, beta, w1, b1, w2, b2, *, eps=1e-6,
                           out_dtype=None):
    """out = s + MLP(LN(s)), s = res + xa. Fuses both residual adds, norm2 and
    the 2-layer MLP (exact erf GELU) into one pass over the activation."""
    # TODO(synk): for planes >= ~1152 on v7x, additionally tile the hidden dim
    # (grid axis over Hd with an f32 accumulator) so w1/w2 need not be
    # simultaneously VMEM-resident.
    shp = res.shape
    C = shp[-1]
    Hd = w1.shape[1]
    out_dtype = out_dtype or res.dtype
    r2 = res.reshape(-1, C)
    a2 = xa.reshape(-1, C)
    N = r2.shape[0]
    bm, Np = _row_tiling(N)
    r2 = _pad_rows(r2, Np)
    a2 = _pad_rows(a2, Np)
    inv_sqrt2 = 1.0 / math.sqrt(2.0)

    def kern(r_ref, a_ref, g_ref, bn_ref, w1_ref, b1_ref, w2_ref, b2_ref, o_ref):
        s = r_ref[...].astype(jnp.float32) + a_ref[...].astype(jnp.float32)
        mean = jnp.mean(s, axis=-1, keepdims=True)
        var = jnp.mean(jnp.square(s - mean), axis=-1, keepdims=True)
        xn = (s - mean) * jax.lax.rsqrt(var + eps)
        xn = xn * g_ref[...] + bn_ref[...]
        h = jnp.dot(xn.astype(jnp.bfloat16), w1_ref[...].astype(jnp.bfloat16),
                    preferred_element_type=jnp.float32)
        h = h + b1_ref[...].astype(jnp.float32)
        h = 0.5 * h * (1.0 + jax.lax.erf(h * inv_sqrt2))   # exact GELU in f32
        o = jnp.dot(h.astype(jnp.bfloat16), w2_ref[...].astype(jnp.bfloat16),
                    preferred_element_type=jnp.float32)
        o = o + b2_ref[...].astype(jnp.float32)
        o_ref[...] = (s + o).astype(o_ref.dtype)

    out = pl.pallas_call(
        kern,
        out_shape=jax.ShapeDtypeStruct((Np, C), out_dtype),
        grid=(Np // bm,),
        in_specs=[
            pl.BlockSpec((bm, C), lambda i: (i, 0)),
            pl.BlockSpec((bm, C), lambda i: (i, 0)),
            _const_spec((1, C)),
            _const_spec((1, C)),
            _const_spec((C, Hd)),
            _const_spec((1, Hd)),
            _const_spec((Hd, C)),
            _const_spec((1, C)),
        ],
        out_specs=pl.BlockSpec((bm, C), lambda i: (i, 0)),
        compiler_params=_cparams(),
    )(r2, a2, gamma.reshape(1, C), beta.reshape(1, C),
      w1, b1.reshape(1, Hd), w2, b2.reshape(1, C))
    return out[:N].reshape(shp[:-1] + (C,))


def attention_pallas(q, qkv, proj_w, proj_b, *, head_nums, planes, out_dtype,
                     group_cap=16, max_tq=256, max_tk=512):
    """Fused multi-head attention + output projection, stacked-head layout.

    q   : (BH, Lq, planes)   heads stacked along channels, 1/sqrt(hd) pre-folded
    qkv : (BH, Lk, 3*planes) k/v are read directly out of the fused qkv output
                             (channel-block BlockSpecs when planes % 128 == 0)
    Flash-style grid (window-group, Lq tile, Lk tile) with online softmax so the
    global-attention path never materializes the full (Lq, Lk) score matrix.
    Output: softmax(q k^T) v @ proj_w + proj_b, shape (BH, Lq, planes).
    """
    BH, Lq, P = q.shape
    Lk = qkv.shape[1]
    hd = P // head_nums

    # ---- tile selection ------------------------------------------------
    tq = Lq if Lq <= max_tq else max_tq
    Lqp = _round_up(Lq, tq)
    tk = Lk if Lk <= max_tk else max_tk
    Lkp = _round_up(Lk, tk)
    need_mask = Lkp != Lk

    G = max(1, min(group_cap, BH, max(1, 1024 // tq)))
    if BH > 1 and (BH + G - 1) // G < 2:        # keep >=2 groups for v7x megacore
        G = (BH + 1) // 2
    BHp = _round_up(BH, G)
    nk = Lkp // tk

    # ---- padding / k,v sourcing ----------------------------------------
    if BHp != BH or Lqp != Lq:
        q = jnp.pad(q, ((0, BHp - BH), (0, Lqp - Lq), (0, 0)))

    if P % 128 == 0:
        # read k / v straight out of the qkv tensor via channel-block indices
        if BHp != BH or Lkp != Lk:
            qkv = jnp.pad(qkv, ((0, BHp - BH), (0, Lkp - Lk), (0, 0)))
        k_arr, v_arr = qkv, qkv
        k_spec = pl.BlockSpec((G, tk, P), lambda g, i, j: (g, j, 1))
        v_spec = pl.BlockSpec((G, tk, P), lambda g, i, j: (g, j, 2))
    else:
        # (8,128) rule: channel-blocking needs P % 128 == 0; slice instead
        k_arr = qkv[:, :, P:2 * P]
        v_arr = qkv[:, :, 2 * P:]
        if BHp != BH or Lkp != Lk:
            padw = ((0, BHp - BH), (0, Lkp - Lk), (0, 0))
            k_arr = jnp.pad(k_arr, padw)
            v_arr = jnp.pad(v_arr, padw)
        k_spec = pl.BlockSpec((G, tk, P), lambda g, i, j: (g, j, 0))
        v_spec = pl.BlockSpec((G, tk, P), lambda g, i, j: (g, j, 0))

    def kern(q_ref, k_ref, v_ref, w_ref, b_ref, o_ref, m_sc, l_sc, acc_sc):
        j = pl.program_id(2)

        @pl.when(j == 0)
        def _():
            m_sc[...] = jnp.full_like(m_sc, -1e30)
            l_sc[...] = jnp.zeros_like(l_sc)
            acc_sc[...] = jnp.zeros_like(acc_sc)

        qb = q_ref[...].astype(jnp.bfloat16)       # scale already folded into qkv_w
        kb = k_ref[...].astype(jnp.bfloat16)
        vb = v_ref[...].astype(jnp.bfloat16)

        if need_mask:
            col = jax.lax.broadcasted_iota(jnp.int32, (1, 1, tk), 2)
            kvalid = (j * tk + col) < Lk

        for h in range(head_nums):
            sl = slice(h * hd, (h + 1) * hd)
            s = jnp.einsum("gqd,gkd->gqk", qb[:, :, sl], kb[:, :, sl],
                           preferred_element_type=jnp.float32)
            if need_mask:
                s = jnp.where(kvalid, s, -1e30)
            m_prev = m_sc[:, :, h:h + 1]
            m_new = jnp.maximum(m_prev, jnp.max(s, axis=-1, keepdims=True))
            alpha = jnp.exp(m_prev - m_new)
            p = jnp.exp(s - m_new)
            l_sc[:, :, h:h + 1] = alpha * l_sc[:, :, h:h + 1] + \
                jnp.sum(p, axis=-1, keepdims=True)
            pv = jnp.einsum("gqk,gkd->gqd", p.astype(jnp.bfloat16), vb[:, :, sl],
                            preferred_element_type=jnp.float32)
            acc_sc[:, :, sl] = alpha * acc_sc[:, :, sl] + pv
            m_sc[:, :, h:h + 1] = m_new

        @pl.when(j == pl.num_programs(2) - 1)
        def _():
            # normalize per head and fuse the output projection + bias
            inv_l = pl.reciprocal(l_sc[...], approx=True)        # (G, tq, nh), EUP
            out = None
            for h in range(head_nums):
                sl = slice(h * hd, (h + 1) * hd)
                oh = (acc_sc[:, :, sl] * inv_l[:, :, h:h + 1]).astype(jnp.bfloat16)
                wh = jnp.broadcast_to(
                    w_ref[sl, :].astype(jnp.bfloat16).reshape(1, hd, P), (G, hd, P))
                ph = jnp.einsum("gqd,gdp->gqp", oh, wh,
                                preferred_element_type=jnp.float32)
                out = ph if out is None else out + ph
            out = out + b_ref[...].astype(jnp.float32)
            o_ref[...] = out.astype(o_ref.dtype)

    out = pl.pallas_call(
        kern,
        out_shape=jax.ShapeDtypeStruct((BHp, Lqp, P), out_dtype),
        grid=(BHp // G, Lqp // tq, nk),
        in_specs=[
            pl.BlockSpec((G, tq, P), lambda g, i, j: (g, i, 0)),
            k_spec,
            v_spec,
            _const_spec((P, P)),
            _const_spec((1, 1, P)),
        ],
        out_specs=pl.BlockSpec((G, tq, P), lambda g, i, j: (g, i, 0)),
        scratch_shapes=[
            pltpu.VMEM((G, tq, head_nums), jnp.float32),   # running max per head
            pltpu.VMEM((G, tq, head_nums), jnp.float32),   # running denom per head
            pltpu.VMEM((G, tq, P), jnp.float32),           # unnormalized acc
        ],
        compiler_params=_cparams(("parallel", "parallel", "arbitrary")),
    )(q, k_arr, v_arr, proj_w, proj_b.reshape(1, 1, P))
    return out[:BH, :Lq]


# ----------------------------------------------------------------------------
# Plain-JAX glue (reshape / transpose / tiny maxpool) -- data movement only
# ----------------------------------------------------------------------------
def maxpool2d_nhwc(x, s):
    # equivalent of nn.MaxPool2d(kernel_size=s, stride=s, ceil_mode=False) on NHWC
    B, H, W, C = x.shape
    Ho, Wo = H // s, W // s
    x = x[:, :Ho * s, :Wo * s, :]
    x = x.reshape(B, Ho, s, Wo, s, C)
    return x.max(axis=(2, 4))


def window_partition(x, ws):
    B, H, W, C = x.shape
    pad_h = (ws - H % ws) % ws
    pad_w = (ws - W % ws) % ws
    if pad_h > 0 or pad_w > 0:
        x = jnp.pad(x, ((0, 0), (0, pad_h), (0, pad_w), (0, 0)))
    Hp, Wp = H + pad_h, W + pad_w
    x = x.reshape(B, Hp // ws, ws, Wp // ws, ws, C)
    windows = x.transpose(0, 1, 3, 2, 4, 5).reshape(-1, ws, ws, C)
    return windows, (Hp, Wp)


def window_unpartition(windows, ws, pad_hw, hw):
    Hp, Wp = pad_hw
    H, W = hw
    B = windows.shape[0] // (Hp * Wp // ws // ws)
    x = windows.reshape(B, Hp // ws, Wp // ws, ws, ws, -1)
    x = x.transpose(0, 1, 3, 2, 4, 5).reshape(B, Hp, Wp, -1)
    if Hp > H or Wp > W:
        x = x[:, :H, :W, :]
    return x


# ----------------------------------------------------------------------------
# MultiScaleAttention / MultiScaleBlock forward (Pallas kernels on the hot path)
# NOTE: expects params from prepare_params() (bf16 weights, scale folded into q).
# ----------------------------------------------------------------------------
def multiscale_attention(x, p, head_nums, pool_stride, planes, *, fuse_ln, eps):
    Bw, H, W, _ = x.shape
    L = H * W
    if fuse_ln:
        qkv = ln_linear_pallas(x, p["norm1_g"], p["norm1_b"],
                               p["qkv_w"], p["qkv_b"], eps=eps,
                               out_dtype=jnp.bfloat16)           # (Bw,H,W,3*planes)
    else:
        qkv = linear_pallas(x, p["qkv_w"], p["qkv_b"], out_dtype=jnp.bfloat16)
    qkv = qkv.reshape(Bw, L, 3 * planes)

    q = qkv[:, :, :planes]                                       # stacked heads
    if pool_stride:
        q = q.reshape(Bw, H, W, planes)
        q = maxpool2d_nhwc(q, pool_stride)
        Hq, Wq = q.shape[1], q.shape[2]
        q = q.reshape(Bw, Hq * Wq, planes)
    else:
        Hq, Wq = H, W

    # TODO(synk): the post-attention `shortcut + x` residual cannot be fused into
    # the attention epilogue because window_unpartition (a permute) sits between
    # them; it is instead fused into the MLP kernel below.
    o = attention_pallas(q, qkv, p["attn_proj_w"], p["attn_proj_b"],
                         head_nums=head_nums, planes=planes,
                         out_dtype=jnp.bfloat16)
    return o.reshape(Bw, Hq, Wq, planes)


def multi_scale_block(x, p, *, inplanes, planes, head_nums, pool_stride,
                      window_size, eps=1e-6):
    B, H0, W0, _ = x.shape
    shortcut = x

    ws = window_size
    pad_needed = ws > 0 and ((H0 % ws != 0) or (W0 % ws != 0))

    # Shortcut branch: LayerNorm fused into the channel projection (always exact).
    if inplanes != planes and pool_stride:
        shortcut = ln_linear_pallas(x, p["norm1_g"], p["norm1_b"],
                                    p["proj_w"], p["proj_b"], eps=eps,
                                    out_dtype=x.dtype)
        shortcut = maxpool2d_nhwc(shortcut, pool_stride)

    # LN+qkv fusion is exact only when window partition adds no padded tokens.
    fuse_ln_qkv = not pad_needed
    pad_hw = None
    H = W = None
    if ws > 0:
        H, W = H0, W0
        if fuse_ln_qkv:
            xa, pad_hw = window_partition(x, ws)     # LN applied inside qkv kernel
        else:
            xn = layernorm_pallas(x, p["norm1_g"], p["norm1_b"], eps=eps)
            xa, pad_hw = window_partition(xn, ws)
    else:
        xa = x                                       # LN fused into qkv kernel

    xa = multiscale_attention(xa, p, head_nums, pool_stride, planes,
                              fuse_ln=fuse_ln_qkv, eps=eps)

    if pool_stride:
        ws = window_size // pool_stride
        H, W = shortcut.shape[1], shortcut.shape[2]
        if ws > 0:
            pad_h = (ws - H % ws) % ws
            pad_w = (ws - W % ws) % ws
            pad_hw = (H + pad_h, W + pad_w)

    if window_size > 0:
        xa = window_unpartition(xa, ws, pad_hw, (H, W))

    # residual + norm2 + MLP + residual, fused (saves two HBM round trips)
    return residual_ln_mlp_pallas(shortcut, xa, p["norm2_g"], p["norm2_b"],
                                  p["mlp_w1"], p["mlp_b1"],
                                  p["mlp_w2"], p["mlp_b2"],
                                  eps=eps, out_dtype=shortcut.dtype)


# ----------------------------------------------------------------------------
# Pure-JAX f32 reference (for numerical verification; uses the original params)
# ----------------------------------------------------------------------------
def _ln_ref(x, g, b, eps=1e-6):
    m = jnp.mean(x, axis=-1, keepdims=True)
    v = jnp.mean((x - m) ** 2, axis=-1, keepdims=True)
    return (x - m) * jax.lax.rsqrt(v + eps) * g + b


def _gelu_ref(x):
    return 0.5 * x * (1.0 + jax.lax.erf(x / math.sqrt(2.0)))


def reference_forward(x, p, *, inplanes, planes, head_nums, pool_stride, window_size):
    shortcut = x
    xn = _ln_ref(x, p["norm1_g"], p["norm1_b"])
    if inplanes != planes and pool_stride:
        shortcut = xn @ p["proj_w"] + p["proj_b"]
        shortcut = maxpool2d_nhwc(shortcut, pool_stride)
    ws = window_size
    pad_hw = None
    H = W = None
    if ws > 0:
        H, W = xn.shape[1], xn.shape[2]
        xa, pad_hw = window_partition(xn, ws)
    else:
        xa = xn
    B2, Ha, Wa, _ = xa.shape
    hd = planes // head_nums
    qkv = xa @ p["qkv_w"] + p["qkv_b"]
    qkv = qkv.reshape(B2, Ha * Wa, 3, head_nums, hd)
    q, k, v = qkv[:, :, 0], qkv[:, :, 1], qkv[:, :, 2]
    if pool_stride:
        q = q.reshape(B2, Ha, Wa, planes)
        q = maxpool2d_nhwc(q, pool_stride)
        Ha, Wa = q.shape[1], q.shape[2]
        q = q.reshape(B2, Ha * Wa, head_nums, hd)
    qT = q.transpose(0, 2, 1, 3)
    kT = k.transpose(0, 2, 1, 3)
    vT = v.transpose(0, 2, 1, 3)
    s = jnp.einsum("bhqd,bhkd->bhqk", qT, kT) / math.sqrt(hd)
    a = jax.nn.softmax(s, axis=-1)
    o = jnp.einsum("bhqk,bhkd->bhqd", a, vT)
    o = o.transpose(0, 2, 1, 3).reshape(B2, Ha, Wa, planes)
    xa = o @ p["attn_proj_w"] + p["attn_proj_b"]
    if pool_stride:
        ws = window_size // pool_stride
        H, W = shortcut.shape[1], shortcut.shape[2]
        pad_h = (ws - H % ws) % ws
        pad_w = (ws - W % ws) % ws
        pad_hw = (H + pad_h, W + pad_w)
    if window_size > 0:
        xa = window_unpartition(xa, ws, pad_hw, (H, W))
    x = shortcut + xa
    xn2 = _ln_ref(x, p["norm2_g"], p["norm2_b"])
    h = _gelu_ref(xn2 @ p["mlp_w1"] + p["mlp_b1"])
    x = x + (h @ p["mlp_w2"] + p["mlp_b2"])
    return x


# ----------------------------------------------------------------------------
# Deterministic parameter init
# ----------------------------------------------------------------------------
def init_params(key, inplanes, planes, head_nums, mlp_ratio):
    hidden = int(planes * mlp_ratio)
    keys = jax.random.split(key, 16)
    n = lambda k, shape, s=0.02: (s * jax.random.normal(k, shape)).astype(jnp.float32)
    p = {
        "norm1_g": 1.0 + n(keys[0], (inplanes,), 0.01),
        "norm1_b": n(keys[1], (inplanes,), 0.01),
        "proj_w": n(keys[2], (inplanes, planes)),
        "proj_b": n(keys[3], (planes,)),
        "qkv_w": n(keys[4], (inplanes, 3 * planes)),
        "qkv_b": n(keys[5], (3 * planes,)),
        "attn_proj_w": n(keys[6], (planes, planes)),
        "attn_proj_b": n(keys[7], (planes,)),
        "norm2_g": 1.0 + n(keys[8], (planes,), 0.01),
        "norm2_b": n(keys[9], (planes,), 0.01),
        "mlp_w1": n(keys[10], (planes, hidden)),
        "mlp_b1": n(keys[11], (hidden,)),
        "mlp_w2": n(keys[12], (hidden, planes)),
        "mlp_b2": n(keys[13], (planes,)),
    }
    return p


# ----------------------------------------------------------------------------
if __name__ == "__main__":
    B, H, W = 2, 8, 8
    inplanes, planes, head_nums = 32, 64, 2
    pool_stride, window_size, mlp_ratio = 2, 4, 4.0

    key = jax.random.PRNGKey(0)
    kx, kp = jax.random.split(key)
    x = jax.random.normal(kx, (B, H, W, inplanes), dtype=jnp.float32)
    params = init_params(kp, inplanes, planes, head_nums, mlp_ratio)
    kparams = prepare_params(params, planes, head_nums)   # bf16 weights, q pre-scaled

    out = multi_scale_block(
        x, kparams,
        inplanes=inplanes, planes=planes, head_nums=head_nums,
        pool_stride=pool_stride, window_size=window_size,
    )
    out = jax.block_until_ready(out)

    ref = reference_forward(
        x, params,
        inplanes=inplanes, planes=planes, head_nums=head_nums,
        pool_stride=pool_stride, window_size=window_size,
    )
    err = float(jnp.max(jnp.abs(out.astype(jnp.float32) - ref)))
    assert out.shape == (B, H // pool_stride, W // pool_stride, planes), out.shape
    # bf16 MXU operands / bf16 intermediate activations vs. pure-f32 reference
    assert err < 2e-2, f"max abs error {err}"
    print("KERNEL_OK")
</pallas_src>

<mosaic_0001>
module attributes {stable_mosaic.version = 11 : i64} {
  func.func @_probe_kernel(%arg0: i32, %arg1: memref<8x128xf32, #tpu.memory_space<vmem>>, %arg2: memref<8x128xf32, #tpu.memory_space<vmem>>) attributes {dimension_semantics = [#tpu.dimension_semantics<arbitrary>], iteration_bounds = array<i64: 2>, scalar_prefetch = 0 : i64, scratch_operands = 0 : i64, tpu.core_type = #tpu.core_type<tc>, window_params = [{pipeline_mode = #tpu.pipeline_mode<synchronous>, transform_indices = @transform_0, window_bounds = array<i64: 8, 128>}, {pipeline_mode = #tpu.pipeline_mode<synchronous>, transform_indices = @transform_1, window_bounds = array<i64: 8, 128>}]} {
    %c0 = arith.constant 0 : index
    %c0_0 = arith.constant 0 : index
    %0 = vector.load %arg1[%c0, %c0_0] : memref<8x128xf32, #tpu.memory_space<vmem>>, vector<8x128xf32>
    %cst = arith.constant 2.000000e+00 : f32
    %1 = vector.broadcast %cst : f32 to vector<8x128xf32>
    %2 = arith.mulf %0, %1 : vector<8x128xf32>
    %c0_1 = arith.constant 0 : index
    %c0_2 = arith.constant 0 : index
    %3 = vector.load %arg2[%c0_1, %c0_2] : memref<8x128xf32, #tpu.memory_space<vmem>>, vector<8x128xf32>
    tpu.vector_store %arg2[%c0_1, %c0_2], %2 {strides = array<i32>} : memref<8x128xf32, #tpu.memory_space<vmem>>, vector<8x128xf32>,
    return
  }
  func.func @transform_0(%arg0: i32) -> (i32, i32) {
    %c0_i32 = arith.constant 0 : i32
    %c0_i32_0 = arith.constant 0 : i32
    %c0_i32_1 = arith.constant 0 : i32
    return %c0_i32, %c0_i32_0 : i32, i32
  }
  func.func @transform_1(%arg0: i32) -> (i32, i32) {
    %c0_i32 = arith.constant 0 : i32
    %c0_i32_0 = arith.constant 0 : i32
    %c0_i32_1 = arith.constant 0 : i32
    return %c0_i32, %c0_i32_0 : i32, i32
  }
}

module attributes {stable_mosaic.version = 11 : i64} {
  func.func @kern(%arg0: i32, %arg1: memref<64x32xf32, #tpu.memory_space<vmem>>, %arg2: memref<1x32xf32, #tpu.memory_space<vmem>>, %arg3: memref<1x32xf32, #tpu.memory_space<vmem>>, %arg4: memref<32x64xbf16, #tpu.memory_space<vmem>>, %arg5: memref<1x64xf32, #tpu.memory_space<vmem>>, %arg6: memref<64x64xf32, #tpu.memory_space<vmem>>) attributes {dimension_semantics = [#tpu.dimension_semantics<parallel>], iteration_bounds = array<i64: 2>, scalar_prefetch = 0 : i64, scratch_operands = 0 : i64, tpu.core_type = #tpu.core_type<tc>, window_params = [{transform_indices = @transform_0, window_bounds = array<i64: 64, 32>}, {pipeline_mode = #tpu.pipeline_mode<synchronous>, transform_indices = @transform_1, window_bounds = array<i64: 1, 32>}, {pipeline_mode = #tpu.pipeline_mode<synchronous>, transform_indices = @transform_2, window_bounds = array<i64: 1, 32>}, {pipeline_mode = #tpu.pipeline_mode<synchronous>, transform_indices = @transform_3, window_bounds = array<i64: 32, 64>}, {pipeline_mode = #tpu.pipeline_mode<synchronous>, transform_indices = @transform_4, window_bounds = array<i64: 1, 64>}, {transform_indices = @transform_5, window_bounds = array<i64: 64, 64>}]} {
    %c0 = arith.constant 0 : index
    %c0_0 = arith.constant 0 : index
    %0 = vector.load %arg1[%c0, %c0_0] : memref<64x32xf32, #tpu.memory_space<vmem>>, vector<64x32xf32>
    %cst = arith.constant dense<0.000000e+00> : vector<64xf32>
    %1 = vector.multi_reduction <add>, %0, %cst [1] : vector<64x32xf32> to vector<64xf32>
    %2 = vector.shape_cast %1 : vector<64xf32> to vector<64x1xf32>
    %cst_1 = arith.constant 3.200000e+01 : f32
    %3 = vector.broadcast %cst_1 : f32 to vector<64x1xf32>
    %4 = arith.divf %2, %3 : vector<64x1xf32>
    %5 = vector.broadcast %4 : vector<64x1xf32> to vector<64x32xf32>
    %6 = arith.subf %0, %5 : vector<64x32xf32>
    %7 = arith.mulf %6, %6 : vector<64x32xf32>
    %cst_2 = arith.constant dense<0.000000e+00> : vector<64xf32>
    %8 = vector.multi_reduction <add>, %7, %cst_2 [1] : vector<64x32xf32> to vector<64xf32>
    %9 = vector.shape_cast %8 : vector<64xf32> to vector<64x1xf32>
    %cst_3 = arith.constant 3.200000e+01 : f32
    %10 = vector.broadcast %cst_3 : f32 to vector<64x1xf32>
    %11 = arith.divf %9, %10 : vector<64x1xf32>
    %12 = vector.broadcast %4 : vector<64x1xf32> to vector<64x32xf32>
    %13 = arith.subf %0, %12 : vector<64x32xf32>
    %cst_4 = arith.constant 9.99999997E-7 : f32
    %14 = vector.broadcast %cst_4 : f32 to vector<64x1xf32>
    %15 = arith.addf %11, %14 : vector<64x1xf32>
    %16 = math.rsqrt %15 : vector<64x1xf32>
    %17 = vector.broadcast %16 : vector<64x1xf32> to vector<64x32xf32>
    %18 = arith.mulf %13, %17 : vector<64x32xf32>
    %c0_5 = arith.constant 0 : index
    %c0_6 = arith.constant 0 : index
    %19 = vector.load %arg2[%c0_5, %c0_6] : memref<1x32xf32, #tpu.memory_space<vmem>>, vector<1x32xf32>
    %20 = vector.broadcast %19 : vector<1x32xf32> to vector<64x32xf32>
    %21 = arith.mulf %18, %20 : vector<64x32xf32>
    %c0_7 = arith.constant 0 : index
    %c0_8 = arith.constant 0 : index
    %22 = vector.load %arg3[%c0_7, %c0_8] : memref<1x32xf32, #tpu.memory_space<vmem>>, vector<1x32xf32>
    %23 = vector.broadcast %22 : vector<1x32xf32> to vector<64x32xf32>
    %24 = arith.addf %21, %23 : vector<64x32xf32>
    %25 = arith.truncf %24 : vector<64x32xf32> to vector<64x32xbf16>
    %c0_9 = arith.constant 0 : index
    %c0_10 = arith.constant 0 : index
    %26 = vector.load %arg4[%c0_9, %c0_10] : memref<32x64xbf16, #tpu.memory_space<vmem>>, vector<32x64xbf16>
    %cst_11 = arith.constant dense<0.000000e+00> : vector<64x64xf32>
    %27 = tpu.matmul %25, %26, %cst_11 {dimension_numbers = #tpu.dot_dimension_numbers<[1], [0], [0], [1], [0, 0, 1, 1], [], []>} : vector<64x32xbf16>, vector<32x64xbf16>, vector<64x64xf32> -> vector<64x64xf32>
    %c0_12 = arith.constant 0 : index
    %c0_13 = arith.constant 0 : index
    %28 = vector.load %arg5[%c0_12, %c0_13] : memref<1x64xf32, #tpu.memory_space<vmem>>, vector<1x64xf32>
    %29 = vector.broadcast %28 : vector<1x64xf32> to vector<64x64xf32>
    %30 = arith.addf %27, %29 : vector<64x64xf32>
    %c0_14 = arith.constant 0 : index
    %c0_15 = arith.constant 0 : index
    %31 = vector.load %arg6[%c0_14, %c0_15] : memref<64x64xf32, #tpu.memory_space<vmem>>, vector<64x64xf32>
    tpu.vector_store %arg6[%c0_14, %c0_15], %30 {strides = array<i32>} : memref<64x64xf32, #tpu.memory_space<vmem>>, vector<64x64xf32>,
    return
  }
  func.func @transform_0(%arg0: i32) -> (i32, i32) {
    %c0_i32 = arith.constant 0 : i32
    %c0_i32_0 = arith.constant 0 : i32
    return %arg0, %c0_i32 : i32, i32
  }
  func.func @transform_1(%arg0: i32) -> (i32, i32) {
    %c0_i32 = arith.constant 0 : i32
    %c0_i32_0 = arith.constant 0 : i32
    %c0_i32_1 = arith.constant 0 : i32
    return %c0_i32, %c0_i32_0 : i32, i32
  }
  func.func @transform_2(%arg0: i32) -> (i32, i32) {
    %c0_i32 = arith.constant 0 : i32
    %c0_i32_0 = arith.constant 0 : i32
    %c0_i32_1 = arith.constant 0 : i32
    return %c0_i32, %c0_i32_0 : i32, i32
  }
  func.func @transform_3(%arg0: i32) -> (i32, i32) {
    %c0_i32 = arith.constant 0 : i32
    %c0_i32_0 = arith.constant 0 : i32
    %c0_i32_1 = arith.constant 0 : i32
    return %c0_i32, %c0_i32_0 : i32, i32
  }
  func.func @transform_4(%arg0: i32) -> (i32, i32) {
    %c0_i32 = arith.constant 0 : i32
    %c0_i32_0 = arith.constant 0 : i32
    %c0_i32_1 = arith.constant 0 : i32
    return %c0_i32, %c0_i32_0 : i32, i32
  }
  func.func @transform_5(%arg0: i32) -> (i32, i32) {
    %c0_i32 = arith.constant 0 : i32
    %c0_i32_0 = arith.constant 0 : i32
    return %arg0, %c0_i32 : i32, i32
  }
}

</mosaic_0001>

<llo_original>
// kernel: tpu_custom_call.1
$region0: #{tpu_custom_call.1}
  #allocation0 [shape = 'u32[]', space=smem, size = 0x4, offset = 0x4, fixed_abs, tag = 'smem constant byte address 0x4 - core index']
  #allocation1 [shape = 'u32[72,128]{1,0:T(1,128)}', space=vmem, size = 0x9000, scoped, tag = 'internal scratch']
  %s0 = inlined_call_operand.hbm [shape: f32[8,128], index: 0, kind: input, shape index: {}]
  %s1 = inlined_call_operand.hbm [shape: f32[8,128], index: 1, kind: output, shape index: {}]
  %s2 = sld [smem:[#allocation0]]
  $region41: #{tpu_custom_call.1} parent=0
    _
  %s4 = ssub.s32 1, %s2
  %s5 = scalar_select 0, %s4, %s2
  $region1: #{tpu_custom_call.1} parent=0
    #allocation2 [shape = 'u8[4096]{0}', space=vmem, size = 0x1000, scoped, tag = 'input window, operand 0, single buffered']
    #allocation3 [shape = 's32[2]{0}', space=sflag, size = 0x8, scoped, tag = 'scoped memory for tpu_custom_call.1']
    #allocation4 [shape = 's32[2]{0}', space=sflag, size = 0x8, scoped, tag = 'scoped memory for tpu_custom_call.1']
    #allocation5 [shape = 'u8[4096]{0}', space=vmem, size = 0x1000, scoped, tag = 'output window, operand 0, single buffered']
    %6 = vsyncpa [#allocation3], 0
    %7 = vsyncpa [#allocation4], 0
    loop: start=0, step=1, limit=4
    $region2: #{tpu_custom_call.1} parent=1 // loop_pre_header
      _
    $region3: #{tpu_custom_call.1} parent=1 // loop_header
      %s9 = sphi 0, %s13
      %p10 = scmp.ge.s32.totalorder %s9, 4
      %s17 = sphi 0, %s17
      %s19 = sphi 0, %s17
      %s20 = sphi 0, %s19
      %s34 = sphi 0, %s20
      %s38 = sphi 0, %s38
      %s40 = sphi 0, %s38
      %s41 = sphi 0, %s40
      %s55 = sphi 0, %s41
    $region4: #{tpu_custom_call.1} parent=1 // loop_header_branch
      %12 = sbr.rel (%p10) target = $region8
    $region5: #{tpu_custom_call.1} parent=1 // loop_body
      %s14 = ssub.s32 %s9, 1
      %s15 = ssub.s32 %s9, 2
      %s16 = sadd.s32 %s9, 1
      %s18 = sadd.s32 %s17, 1
      %p21 = scmp.eq.s32.totalorder %s9, 1
      %p22 = scmp.ne.s32.totalorder %s17, %s19
      %p23 = scmp.eq.s32.totalorder %s9, 0
      %p24 = por %p22, %p23
      %p25 = scmp.ne.s32.totalorder %s17, %s19
      %p26 = scmp.eq.s32.totalorder %s14, 1
      %p27 = por %p25, %p26
      %p28 = scmp.ne.s32.totalorder %s19, %s20
      %p29 = scmp.eq.s32.totalorder %s14, 0
      %p30 = por %p28, %p29
      %p31 = scmp.ne.s32.totalorder %s19, %s20
      %p32 = scmp.eq.s32.totalorder %s15, 1
      %p33 = por %p31, %p32
      %p35 = scmp.ne.s32.totalorder %s20, %s34
      %p36 = scmp.eq.s32.totalorder %s15, 0
      %p37 = por %p35, %p36
      %s39 = sadd.s32 %s38, 1
      %p42 = scmp.eq.s32.totalorder %s9, 1
      %p43 = scmp.ne.s32.totalorder %s38, %s40
      %p44 = scmp.eq.s32.totalorder %s9, 0
      %p45 = por %p43, %p44
      %p46 = scmp.ne.s32.totalorder %s38, %s40
      %p47 = scmp.eq.s32.totalorder %s14, 1
      %p48 = por %p46, %p47
      %p49 = scmp.ne.s32.totalorder %s40, %s41
      %p50 = scmp.eq.s32.totalorder %s14, 0
      %p51 = por %p49, %p50
      %p52 = scmp.ne.s32.totalorder %s40, %s41
      %p53 = scmp.eq.s32.totalorder %s15, 1
      %p54 = por %p52, %p53
      %p56 = scmp.ne.s32.totalorder %s41, %s55
      %p57 = scmp.eq.s32.totalorder %s15, 0
      %p58 = por %p56, %p57
      %p59 = scmp.le.s32.totalorder 1, %s9
      %p60 = scmp.lt.s32.totalorder %s9, 3
      %p61 = pnand %p59, %p60
      %p62 = pneg %p61
      // Predicated region
      $region9: #{tpu_custom_call.1} parent=5 // pred_check
        _
      $region10: #{tpu_custom_call.1} parent=5 // pred_check_branch
        %64 = sbr.rel (%p61) target = $region12
      $region11: #{tpu_custom_call.1} parent=5 // pred_region
        %s65 = ssub.s32 %s9, 1
        // Predicated region
        $region13: #{tpu_custom_call.1} parent=11 // pred_check
          %p66 = pneg %p30
        $region14: #{tpu_custom_call.1} parent=11 // pred_check_branch
          %68 = sbr.rel (%p66) target = $region16
        $region15: #{tpu_custom_call.1} parent=11 // pred_region
          %70 = vsyncadd [#allocation3], 0
          %s72 = sshll.u32 %s0, 4
          %s73 = int_to_ptr.hbm [resolvable:$true] %s72
          %s74 = sshll.u32 [#allocation2], 4
          %s75 = int_to_ptr.vmem [resolvable:$true] %s74
          %77 = dma.hbm_to_vmem [thread:$0]  %s73, 128, %s75, [#allocation3]
        $region16: #{tpu_custom_call.1} parent=11 // pred_fallthru
          _
      $region12: #{tpu_custom_call.1} parent=5 // pred_fallthru
        _
      %p78 = scmp.lt.s32.totalorder %s9, 2
      // Predicated region
      $region17: #{tpu_custom_call.1} parent=5 // pred_check
        %p79 = pneg %p78
      $region18: #{tpu_custom_call.1} parent=5 // pred_check_branch
        %81 = sbr.rel (%p79) target = $region20
      $region19: #{tpu_custom_call.1} parent=5 // pred_region
        _
      $region20: #{tpu_custom_call.1} parent=5 // pred_fallthru
        _
      %p82 = scmp.le.s32.totalorder 1, %s9
      %p83 = scmp.lt.s32.totalorder %s9, 3
      %p84 = pnand %p82, %p83
      %p85 = pneg %p84
      // Predicated region
      $region21: #{tpu_custom_call.1} parent=5 // pred_check
        _
      $region22: #{tpu_custom_call.1} parent=5 // pred_check_branch
        %87 = sbr.rel (%p84) target = $region24
      $region23: #{tpu_custom_call.1} parent=5 // pred_region
        %s88 = ssub.s32 %s9, 1
        // Predicated region
        $region25: #{tpu_custom_call.1} parent=23 // pred_check
          %p89 = pneg %p30
        $region26: #{tpu_custom_call.1} parent=23 // pred_check_branch
          %91 = sbr.rel (%p89) target = $region28
        $region27: #{tpu_custom_call.1} parent=23 // pred_region
          %93 = dma.done [#allocation3], 128
        $region28: #{tpu_custom_call.1} parent=23 // pred_fallthru
          _
        %p94 = pneg %p30
        %p95 = pneg %p27
        %p96 = pneg %p51
        %p97 = pneg %p48
        %v98 = vld [vmem:[#allocation2] sm:$0xff]
        %v99 = vmul.f32 %v98, 2.0
        %100 = vst [vmem:[#allocation5] sm:$0xff] %v99
        // Predicated region
        $region29: #{tpu_custom_call.1} parent=23 // pred_check
          %p101 = pneg %p48
        $region30: #{tpu_custom_call.1} parent=23 // pred_check_branch
          %103 = sbr.rel (%p101) target = $region32
        $region31: #{tpu_custom_call.1} parent=23 // pred_region
          %105 = vsyncadd [#allocation4], 0
          %s107 = sshll.u32 [#allocation5], 4
          %s108 = int_to_ptr.vmem [resolvable:$true] %s107
          %s109 = sshll.u32 %s1, 4
          %s110 = int_to_ptr.hbm [resolvable:$true] %s109
          %112 = dma.vmem_to_hbm [thread:$0]  %s108, 128, %s110, [#allocation4]
        $region32: #{tpu_custom_call.1} parent=23 // pred_fallthru
          _
        // Predicated region
        $region33: #{tpu_custom_call.1} parent=23 // pred_check
          %p113 = pneg %p48
        $region34: #{tpu_custom_call.1} parent=23 // pred_check_branch
          %115 = sbr.rel (%p113) target = $region36
        $region35: #{tpu_custom_call.1} parent=23 // pred_region
          %117 = dma.done [#allocation4], 128
        $region36: #{tpu_custom_call.1} parent=23 // pred_fallthru
          _
      $region24: #{tpu_custom_call.1} parent=5 // pred_fallthru
        _
      %p118 = scmp.le.s32.totalorder 2, %s9
      // Predicated region
      $region37: #{tpu_custom_call.1} parent=5 // pred_check
        %p119 = pneg %p118
      $region38: #{tpu_custom_call.1} parent=5 // pred_check_branch
        %121 = sbr.rel (%p119) target = $region40
      $region39: #{tpu_custom_call.1} parent=5 // pred_region
        %s122 = ssub.s32 %s9, 2
      $region40: #{tpu_custom_call.1} parent=5 // pred_fallthru
        _
    $region6: #{tpu_custom_call.1} parent=1 // loop_footer
      %s13 = sadd.s32 1, %s9
    $region7: #{tpu_custom_call.1} parent=1 // loop_footer_branch
      %8 = sbr.rel target = $region3
    $region8: #{tpu_custom_call.1} parent=1 // loop_exit
      _
    %123 = vsyncpa [#allocation3], 1
    %s124 = scalar_lea.sflag [#allocation3], 1
    %125 = vsyncpa %s124, 1
    %126 = vsyncpa [#allocation4], 1
    %s127 = scalar_lea.sflag [#allocation4], 1
    %128 = vsyncpa %s127, 1

// kernel: tpu_custom_call.1
$region0: #{tpu_custom_call.1}
  #allocation0 [shape = 'u32[]', space=smem, size = 0x4, offset = 0x4, fixed_abs, tag = 'smem constant byte address 0x4 - core index']
  #allocation1 [shape = 'u32[72,128]{1,0:T(1,128)}', space=vmem, size = 0x9000, scoped, tag = 'internal scratch']
  %s0 = inlined_call_operand.vmem [shape: f32[128,32], index: 0, kind: input, shape index: {}]
  %s1 = inlined_call_operand.vmem [shape: f32[1,32], index: 1, kind: input, shape index: {}]
  %s2 = inlined_call_operand.vmem [shape: f32[1,32], index: 2, kind: input, shape index: {}]
  %s3 = inlined_call_operand.vmem [shape: bf16[32,64], index: 3, kind: input, shape index: {}]
  %s4 = inlined_call_operand.vmem [shape: f32[1,64], index: 4, kind: input, shape index: {}]
  %s5 = inlined_call_operand.vmem [shape: f32[128,64], index: 5, kind: output, shape index: {}]
  %s6 = sld [smem:[#allocation0]]
  $region53: #{tpu_custom_call.1} parent=0
    _
  %s8 = ssub.s32 1, %s6
  %s9 = scalar_select 0, %s8, %s6
  loop: start=0, step=1, limit=4
  $region2: #{tpu_custom_call.1} parent=0 // loop_pre_header
    _
  $region3: #{tpu_custom_call.1} parent=0 // loop_header
    %s11 = sphi 0, %s15
    %p12 = scmp.ge.s32.totalorder %s11, 4
    %s21 = sphi 0, %s23
    %s24 = sphi 0, %s21
    %s25 = sphi 0, %s24
    %s41 = sphi 0, %s25
    %s45 = sphi 0, %s45
    %s47 = sphi 0, %s45
    %s48 = sphi 0, %s47
    %s62 = sphi 0, %s48
    %s66 = sphi 0, %s66
    %s68 = sphi 0, %s66
    %s69 = sphi 0, %s68
    %s83 = sphi 0, %s69
    %s87 = sphi 0, %s87
    %s89 = sphi 0, %s87
    %s90 = sphi 0, %s89
    %s104 = sphi 0, %s90
    %s108 = sphi 0, %s108
    %s110 = sphi 0, %s108
    %s111 = sphi 0, %s110
    %s125 = sphi 0, %s111
    %s131 = sphi 0, %s133
    %s134 = sphi 0, %s131
    %s135 = sphi 0, %s134
    %s151 = sphi 0, %s135
  $region4: #{tpu_custom_call.1} parent=0 // loop_header_branch
    %14 = sbr.rel (%p12) target = $region8
  $region5: #{tpu_custom_call.1} parent=0 // loop_body
    %s16 = ssub.s32 %s11, 1
    %s17 = ssub.s32 %s11, 2
    %s18 = sadd.s32 %s11, 1
    %s19 = ssub.s32 %s11, %s18
    %p20 = scmp.eq.s32.totalorder %s19, 0
    %s22 = sadd.s32 %s21, 1
    %s23 = scalar_select %p20, %s21, %s22
    %p26 = pneg %p20
    %p27 = scmp.eq.s32.totalorder %s11, 1
    %p28 = por %p26, %p27
    %p29 = scmp.ne.s32.totalorder %s21, %s24
    %p30 = scmp.eq.s32.totalorder %s11, 0
    %p31 = por %p29, %p30
    %p32 = scmp.ne.s32.totalorder %s21, %s24
    %p33 = scmp.eq.s32.totalorder %s16, 1
    %p34 = por %p32, %p33
    %p35 = scmp.ne.s32.totalorder %s24, %s25
    %p36 = scmp.eq.s32.totalorder %s16, 0
    %p37 = por %p35, %p36
    %p38 = scmp.ne.s32.totalorder %s24, %s25
    %p39 = scmp.eq.s32.totalorder %s17, 1
    %p40 = por %p38, %p39
    %p42 = scmp.ne.s32.totalorder %s25, %s41
    %p43 = scmp.eq.s32.totalorder %s17, 0
    %p44 = por %p42, %p43
    %s46 = sadd.s32 %s45, 1
    %p49 = scmp.eq.s32.totalorder %s11, 1
    %p50 = scmp.ne.s32.totalorder %s45, %s47
    %p51 = scmp.eq.s32.totalorder %s11, 0
    %p52 = por %p50, %p51
    %p53 = scmp.ne.s32.totalorder %s45, %s47
    %p54 = scmp.eq.s32.totalorder %s16, 1
    %p55 = por %p53, %p54
    %p56 = scmp.ne.s32.totalorder %s47, %s48
    %p57 = scmp.eq.s32.totalorder %s16, 0
    %p58 = por %p56, %p57
    %p59 = scmp.ne.s32.totalorder %s47, %s48
    %p60 = scmp.eq.s32.totalorder %s17, 1
    %p61 = por %p59, %p60
    %p63 = scmp.ne.s32.totalorder %s48, %s62
    %p64 = scmp.eq.s32.totalorder %s17, 0
    %p65 = por %p63, %p64
    %s67 = sadd.s32 %s66, 1
    %p70 = scmp.eq.s32.totalorder %s11, 1
    %p71 = scmp.ne.s32.totalorder %s66, %s68
    %p72 = scmp.eq.s32.totalorder %s11, 0
    %p73 = por %p71, %p72
    %p74 = scmp.ne.s32.totalorder %s66, %s68
    %p75 = scmp.eq.s32.totalorder %s16, 1
    %p76 = por %p74, %p75
    %p77 = scmp.ne.s32.totalorder %s68, %s69
    %p78 = scmp.eq.s32.totalorder %s16, 0
    %p79 = por %p77, %p78
    %p80 = scmp.ne.s32.totalorder %s68, %s69
    %p81 = scmp.eq.s32.totalorder %s17, 1
    %p82 = por %p80, %p81
    %p84 = scmp.ne.s32.totalorder %s69, %s83
    %p85 = scmp.eq.s32.totalorder %s17, 0
    %p86 = por %p84, %p85
    %s88 = sadd.s32 %s87, 1
    %p91 = scmp.eq.s32.totalorder %s11, 1
    %p92 = scmp.ne.s32.totalorder %s87, %s89
    %p93 = scmp.eq.s32.totalorder %s11, 0
    %p94 = por %p92, %p93
    %p95 = scmp.ne.s32.totalorder %s87, %s89
    %p96 = scmp.eq.s32.totalorder %s16, 1
    %p97 = por %p95, %p96
    %p98 = scmp.ne.s32.totalorder %s89, %s90
    %p99 = scmp.eq.s32.totalorder %s16, 0
    %p100 = por %p98, %p99
    %p101 = scmp.ne.s32.totalorder %s89, %s90
    %p102 = scmp.eq.s32.totalorder %s17, 1
    %p103 = por %p101, %p102
    %p105 = scmp.ne.s32.totalorder %s90, %s104
    %p106 = scmp.eq.s32.totalorder %s17, 0
    %p107 = por %p105, %p106
    %s109 = sadd.s32 %s108, 1
    %p112 = scmp.eq.s32.totalorder %s11, 1
    %p113 = scmp.ne.s32.totalorder %s108, %s110
    %p114 = scmp.eq.s32.totalorder %s11, 0
    %p115 = por %p113, %p114
    %p116 = scmp.ne.s32.totalorder %s108, %s110
    %p117 = scmp.eq.s32.totalorder %s16, 1
    %p118 = por %p116, %p117
    %p119 = scmp.ne.s32.totalorder %s110, %s111
    %p120 = scmp.eq.s32.totalorder %s16, 0
    %p121 = por %p119, %p120
    %p122 = scmp.ne.s32.totalorder %s110, %s111
    %p123 = scmp.eq.s32.totalorder %s17, 1
    %p124 = por %p122, %p123
    %p126 = scmp.ne.s32.totalorder %s111, %s125
    %p127 = scmp.eq.s32.totalorder %s17, 0
    %p128 = por %p126, %p127
    %s129 = ssub.s32 %s11, %s18
    %p130 = scmp.eq.s32.totalorder %s129, 0
    %s132 = sadd.s32 %s131, 1
    %s133 = scalar_select %p130, %s131, %s132
    %p136 = pneg %p130
    %p137 = scmp.eq.s32.totalorder %s11, 1
    %p138 = por %p136, %p137
    %p139 = scmp.ne.s32.totalorder %s131, %s134
    %p140 = scmp.eq.s32.totalorder %s11, 0
    %p141 = por %p139, %p140
    %p142 = scmp.ne.s32.totalorder %s131, %s134
    %p143 = scmp.eq.s32.totalorder %s16, 1
    %p144 = por %p142, %p143
    %p145 = scmp.ne.s32.totalorder %s134, %s135
    %p146 = scmp.eq.s32.totalorder %s16, 0
    %p147 = por %p145, %p146
    %p148 = scmp.ne.s32.totalorder %s134, %s135
    %p149 = scmp.eq.s32.totalorder %s17, 1
    %p150 = por %p148, %p149
    %p152 = scmp.ne.s32.totalorder %s135, %s151
    %p153 = scmp.eq.s32.totalorder %s17, 0
    %p154 = por %p152, %p153
    %p155 = scmp.le.s32.totalorder 1, %s11
    %p156 = scmp.lt.s32.totalorder %s11, 3
    %p157 = pnand %p155, %p156
    %p158 = pneg %p157
    // Predicated region
    $region9: #{tpu_custom_call.1} parent=5 // pred_check
      _
    $region10: #{tpu_custom_call.1} parent=5 // pred_check_branch
      %160 = sbr.rel (%p157) target = $region12
    $region11: #{tpu_custom_call.1} parent=5 // pred_region
      %s161 = ssub.s32 %s11, 1
      // Predicated region
      $region13: #{tpu_custom_call.1} parent=11 // pred_check
        %p162 = pneg %p58
      $region14: #{tpu_custom_call.1} parent=11 // pred_check_branch
        %164 = sbr.rel (%p162) target = $region16
      $region15: #{tpu_custom_call.1} parent=11 // pred_region
        _
      $region16: #{tpu_custom_call.1} parent=11 // pred_fallthru
        _
      // Predicated region
      $region17: #{tpu_custom_call.1} parent=11 // pred_check
        %p165 = pneg %p79
      $region18: #{tpu_custom_call.1} parent=11 // pred_check_branch
        %167 = sbr.rel (%p165) target = $region20
      $region19: #{tpu_custom_call.1} parent=11 // pred_region
        _
      $region20: #{tpu_custom_call.1} parent=11 // pred_fallthru
        _
      // Predicated region
      $region21: #{tpu_custom_call.1} parent=11 // pred_check
        %p168 = pneg %p100
      $region22: #{tpu_custom_call.1} parent=11 // pred_check_branch
        %170 = sbr.rel (%p168) target = $region24
      $region23: #{tpu_custom_call.1} parent=11 // pred_region
        _
      $region24: #{tpu_custom_call.1} parent=11 // pred_fallthru
        _
      // Predicated region
      $region25: #{tpu_custom_call.1} parent=11 // pred_check
        %p171 = pneg %p121
      $region26: #{tpu_custom_call.1} parent=11 // pred_check_branch
        %173 = sbr.rel (%p171) target = $region28
      $region27: #{tpu_custom_call.1} parent=11 // pred_region
        _
      $region28: #{tpu_custom_call.1} parent=11 // pred_fallthru
        _
    $region12: #{tpu_custom_call.1} parent=5 // pred_fallthru
      _
    %p174 = scmp.lt.s32.totalorder %s11, 2
    // Predicated region
    $region29: #{tpu_custom_call.1} parent=5 // pred_check
      %p175 = pneg %p174
    $region30: #{tpu_custom_call.1} parent=5 // pred_check_branch
      %177 = sbr.rel (%p175) target = $region32
    $region31: #{tpu_custom_call.1} parent=5 // pred_region
      // Predicated region
      $region33: #{tpu_custom_call.1} parent=31 // pred_check
        %p178 = pneg %p31
      $region34: #{tpu_custom_call.1} parent=31 // pred_check_branch
        %180 = sbr.rel (%p178) target = $region36
      $region35: #{tpu_custom_call.1} parent=31 // pred_region
        %s181 = smul.u32 8, %s11
        %p182 = scmp.lt.s32.totalorder %s181, 15
        %s183 = scalar_select %p182, %s181, 15
        %s184 = smul.addr %s183, 8
        %s185 = scalar_lea.vmem %s0, %s184
        %s186 = smul.u32 8, %s11
      $region36: #{tpu_custom_call.1} parent=31 // pred_fallthru
        _
    $region32: #{tpu_custom_call.1} parent=5 // pred_fallthru
      _
    %p187 = scmp.le.s32.totalorder 1, %s11
    %p188 = scmp.lt.s32.totalorder %s11, 3
    %p189 = pnand %p187, %p188
    %p190 = pneg %p189
    // Predicated region
    $region37: #{tpu_custom_call.1} parent=5 // pred_check
      _
    $region38: #{tpu_custom_call.1} parent=5 // pred_check_branch
      %192 = sbr.rel (%p189) target = $region40
    $region39: #{tpu_custom_call.1} parent=5 // pred_region
      %s193 = ssub.s32 %s11, 1
      %s194 = smul.u32 8, %s16
      %p195 = scmp.lt.s32.totalorder %s194, 15
      %s196 = scalar_select %p195, %s194, 15
      %s197 = smul.addr %s196, 8
      %s198 = scalar_lea.vmem %s0, %s197
      %p199 = pneg %p37
      %p200 = pneg %p34
      %p201 = pneg %p58
      %p202 = pneg %p55
      %p203 = pneg %p79
      %p204 = pneg %p76
      %p205 = pneg %p100
      %p206 = pneg %p97
      %p207 = pneg %p121
      %p208 = pneg %p118
      %p209 = pneg %p147
      %p210 = pneg %p144
      %s211 = smul.u32 8, %s16
      %p212 = scmp.lt.s32.totalorder %s211, 15
      %s213 = scalar_select %p212, %s211, 15
      %s214 = smul.addr %s213, 8
      %s215 = scalar_lea.vmem %s5, %s214
      %s216 = smul.u32 8, %s16
      %p217 = scmp.lt.s32.totalorder %s216, 15
      %s218 = scalar_select %p217, %s216, 15
      %s219 = smul.addr %s218, 8
      %s220 = scalar_lea.vmem %s0, %s219
      %s221 = smul.u32 8, %s16
      %s222 = smul.u32 8, %s16
      %p223 = scmp.lt.s32.totalorder %s222, 15
      %s224 = scalar_select %p223, %s222, 15
      %s225 = smul.addr %s224, 8
      %s226 = scalar_lea.vmem %s5, %s225
      %s227 = smul.u32 8, %s16
      %v229 = vld [vmem:[%s220] sm:$0xff]
      %v230 = vld [vmem:[%s220 + $0x8] sm:$0xff]
      %v231 = vld [vmem:[%s220 + $0x10] sm:$0xff]
      %v232 = vld [vmem:[%s220 + $0x18] sm:$0xff]
      %v233 = vld [vmem:[%s220 + $0x20] sm:$0xff]
      %v234 = vld [vmem:[%s220 + $0x28] sm:$0xff]
      %v235 = vld [vmem:[%s220 + $0x30] sm:$0xff]
      %v236 = vld [vmem:[%s220 + $0x38] sm:$0xff]
      %vm237 = vcmask 261120
      %v238 = vsel %vm237, %v229, 0.0
      %239 = vadd.xlane.f32.xlu0 %v238
      %v240 = vpop.xlane.xlu0 %239
      %v241 = vsel %vm237, %v230, 0.0
      %242 = vadd.xlane.f32.xlu0 %v241
      %v243 = vpop.xlane.xlu0 %242
      %v244 = vsel %vm237, %v231, 0.0
      %245 = vadd.xlane.f32.xlu0 %v244
      %v246 = vpop.xlane.xlu0 %245
      %v247 = vsel %vm237, %v232, 0.0
      %248 = vadd.xlane.f32.xlu0 %v247
      %v249 = vpop.xlane.xlu0 %248
      %v250 = vsel %vm237, %v233, 0.0
      %251 = vadd.xlane.f32.xlu0 %v250
      %v252 = vpop.xlane.xlu0 %251
      %v253 = vsel %vm237, %v234, 0.0
      %254 = vadd.xlane.f32.xlu0 %v253
      %v255 = vpop.xlane.xlu0 %254
      %v256 = vsel %vm237, %v235, 0.0
      %257 = vadd.xlane.f32.xlu0 %v256
      %v258 = vpop.xlane.xlu0 %257
      %v259 = vsel %vm237, %v236, 0.0
      %260 = vadd.xlane.f32.xlu0 %v259
      %v261 = vpop.xlane.xlu0 %260
      %v262 = vrcp.pop 32.0
      %v263 = vmul.f32 32.0, %v262
      %v264 = vsub.f32 1.0, %v263
      %v265 = vmul.f32 %v262, %v264
      %v266 = vadd.f32 %v262, %v265
      %vm267 = vweird.f32 %v262
      %v268 = vsel %vm267, %v262, %v266
      %v269 = vmul.f32 %v240, %v268
      %v270 = vmul.f32 %v243, %v268
      %v271 = vmul.f32 %v246, %v268
      %v272 = vmul.f32 %v249, %v268
      %v273 = vmul.f32 %v252, %v268
      %v274 = vmul.f32 %v255, %v268
      %v275 = vmul.f32 %v258, %v268
      %v276 = vmul.f32 %v261, %v268
      %v277 = vsub.f32 %v229, %v269
      %v278 = vsub.f32 %v230, %v270
      %v279 = vsub.f32 %v231, %v271
      %v280 = vsub.f32 %v232, %v272
      %v281 = vsub.f32 %v233, %v273
      %v282 = vsub.f32 %v234, %v274
      %v283 = vsub.f32 %v235, %v275
      %v284 = vsub.f32 %v236, %v276
      %v285 = vmul.f32 %v277, %v277
      %v286 = vmul.f32 %v278, %v278
      %v287 = vmul.f32 %v279, %v279
      %v288 = vmul.f32 %v280, %v280
      %v289 = vmul.f32 %v281, %v281
      %v290 = vmul.f32 %v282, %v282
      %v291 = vmul.f32 %v283, %v283
      %v292 = vmul.f32 %v284, %v284
      %v293 = vsel %vm237, %v285, 0.0
      %294 = vadd.xlane.f32.xlu0 %v293
      %v295 = vpop.xlane.xlu0 %294
      %v296 = vsel %vm237, %v286, 0.0
      %297 = vadd.xlane.f32.xlu0 %v296
      %v298 = vpop.xlane.xlu0 %297
      %v299 = vsel %vm237, %v287, 0.0
      %300 = vadd.xlane.f32.xlu0 %v299
      %v301 = vpop.xlane.xlu0 %300
      %v302 = vsel %vm237, %v288, 0.0
      %303 = vadd.xlane.f32.xlu0 %v302
      %v304 = vpop.xlane.xlu0 %303
      %v305 = vsel %vm237, %v289, 0.0
      %306 = vadd.xlane.f32.xlu0 %v305
      %v307 = vpop.xlane.xlu0 %306
      %v308 = vsel %vm237, %v290, 0.0
      %309 = vadd.xlane.f32.xlu0 %v308
      %v310 = vpop.xlane.xlu0 %309
      %v311 = vsel %vm237, %v291, 0.0
      %312 = vadd.xlane.f32.xlu0 %v311
      %v313 = vpop.xlane.xlu0 %312
      %v314 = vsel %vm237, %v292, 0.0
      %315 = vadd.xlane.f32.xlu0 %v314
      %v316 = vpop.xlane.xlu0 %315
      %v317 = vmul.f32 %v295, %v268
      %v318 = vmul.f32 %v298, %v268
      %v319 = vmul.f32 %v301, %v268
      %v320 = vmul.f32 %v304, %v268
      %v321 = vmul.f32 %v307, %v268
      %v322 = vmul.f32 %v310, %v268
      %v323 = vmul.f32 %v313, %v268
      %v324 = vmul.f32 %v316, %v268
      %v325 = vadd.f32 %v317, 1e-06
      %v326 = vadd.f32 %v318, 1e-06
      %v327 = vadd.f32 %v319, 1e-06
      %v328 = vadd.f32 %v320, 1e-06
      %v329 = vadd.f32 %v321, 1e-06
      %v330 = vadd.f32 %v322, 1e-06
      %v331 = vadd.f32 %v323, 1e-06
      %v332 = vadd.f32 %v324, 1e-06
      %v333 = vrsqrt.pop %v325
      %v334 = vmul.f32 %v333, %v325
      %v335 = vmul.f32 %v334, %v333
      %v336 = vmul.f32 0.5, %v335
      %v337 = vsub.f32 1.5, %v336
      %v338 = vmul.f32 %v333, %v337
      %vm339 = vweird.f32 %v325
      %vm340 = vweird.f32 %v333
      %vm341 = vmor %vm339, %vm340
      %v342 = vsel %vm341, %v333, %v338
      %v343 = vrsqrt.pop %v326
      %v344 = vmul.f32 %v343, %v326
      %v345 = vmul.f32 %v344, %v343
      %v346 = vmul.f32 0.5, %v345
      %v347 = vsub.f32 1.5, %v346
      %v348 = vmul.f32 %v343, %v347
      %vm349 = vweird.f32 %v326
      %vm350 = vweird.f32 %v343
      %vm351 = vmor %vm349, %vm350
      %v352 = vsel %vm351, %v343, %v348
      %v353 = vrsqrt.pop %v327
      %v354 = vmul.f32 %v353, %v327
      %v355 = vmul.f32 %v354, %v353
      %v356 = vmul.f32 0.5, %v355
      %v357 = vsub.f32 1.5, %v356
      %v358 = vmul.f32 %v353, %v357
      %vm359 = vweird.f32 %v327
      %vm360 = vweird.f32 %v353
      %vm361 = vmor %vm359, %vm360
      %v362 = vsel %vm361, %v353, %v358
      %v363 = vrsqrt.pop %v328
      %v364 = vmul.f32 %v363, %v328
      %v365 = vmul.f32 %v364, %v363
      %v366 = vmul.f32 0.5, %v365
      %v367 = vsub.f32 1.5, %v366
      %v368 = vmul.f32 %v363, %v367
      %vm369 = vweird.f32 %v328
      %vm370 = vweird.f32 %v363
      %vm371 = vmor %vm369, %vm370
      %v372 = vsel %vm371, %v363, %v368
      %v373 = vrsqrt.pop %v329
      %v374 = vmul.f32 %v373, %v329
      %v375 = vmul.f32 %v374, %v373
      %v376 = vmul.f32 0.5, %v375
      %v377 = vsub.f32 1.5, %v376
      %v378 = vmul.f32 %v373, %v377
      %vm379 = vweird.f32 %v329
      %vm380 = vweird.f32 %v373
      %vm381 = vmor %vm379, %vm380
      %v382 = vsel %vm381, %v373, %v378
      %v383 = vrsqrt.pop %v330
      %v384 = vmul.f32 %v383, %v330
      %v385 = vmul.f32 %v384, %v383
      %v386 = vmul.f32 0.5, %v385
      %v387 = vsub.f32 1.5, %v386
      %v388 = vmul.f32 %v383, %v387
      %vm389 = vweird.f32 %v330
      %vm390 = vweird.f32 %v383
      %vm391 = vmor %vm389, %vm390
      %v392 = vsel %vm391, %v383, %v388
      %v393 = vrsqrt.pop %v331
      %v394 = vmul.f32 %v393, %v331
      %v395 = vmul.f32 %v394, %v393
      %v396 = vmul.f32 0.5, %v395
      %v397 = vsub.f32 1.5, %v396
      %v398 = vmul.f32 %v393, %v397
      %vm399 = vweird.f32 %v331
      %vm400 = vweird.f32 %v393
      %vm401 = vmor %vm399, %vm400
      %v402 = vsel %vm401, %v393, %v398
      %v403 = vrsqrt.pop %v332
      %v404 = vmul.f32 %v403, %v332
      %v405 = vmul.f32 %v404, %v403
      %v406 = vmul.f32 0.5, %v405
      %v407 = vsub.f32 1.5, %v406
      %v408 = vmul.f32 %v403, %v407
      %vm409 = vweird.f32 %v332
      %vm410 = vweird.f32 %v403
      %vm411 = vmor %vm409, %vm410
      %v412 = vsel %vm411, %v403, %v408
      %v413 = vmul.f32 %v277, %v342
      %v414 = vmul.f32 %v278, %v352
      %v415 = vmul.f32 %v279, %v362
      %v416 = vmul.f32 %v280, %v372
      %v417 = vmul.f32 %v281, %v382
      %v418 = vmul.f32 %v282, %v392
      %v419 = vmul.f32 %v283, %v402
      %v420 = vmul.f32 %v284, %v412
      %v421 = vld [vmem:[%s1] sm:$0x1]
      %v423 = vperm.slane %v421, 0
      %v425 = vmul.f32 %v413, %v423
      %v426 = vmul.f32 %v414, %v423
      %v427 = vmul.f32 %v415, %v423
      %v428 = vmul.f32 %v416, %v423
      %v429 = vmul.f32 %v417, %v423
      %v430 = vmul.f32 %v418, %v423
      %v431 = vmul.f32 %v419, %v423
      %v432 = vmul.f32 %v420, %v423
      %v433 = vld [vmem:[%s2] sm:$0x1]
      %v435 = vperm.slane %v433, 0
      %v437 = vadd.f32 %v425, %v435
      %v438 = vadd.f32 %v426, %v435
      %v439 = vadd.f32 %v427, %v435
      %v440 = vadd.f32 %v428, %v435
      %v441 = vadd.f32 %v429, %v435
      %v442 = vadd.f32 %v430, %v435
      %v443 = vadd.f32 %v431, %v435
      %v444 = vadd.f32 %v432, %v435
      %v445 = vpack.c.bf16 %v438, %v437
      %v446 = vpack.c.bf16 %v440, %v439
      %v447 = vpack.c.bf16 %v442, %v441
      %v448 = vpack.c.bf16 %v444, %v443
      %v449 = vld [vmem:[%s3] sm:$0xf]
      %v450 = vld [vmem:[%s3 + $0x4] sm:$0xf]
      %v451 = vld [vmem:[%s3 + $0x8] sm:$0xf]
      %v452 = vld [vmem:[%s3 + $0xc] sm:$0xf]
      %v453 = vld [vmem:[%s4] sm:$0x1]
      %v455 = vperm.slane %v453, 0
      %v461 = vunpack.c.l.b16 %v449
      %v462 = vunpack.c.l.b16 %v450
      %v463 = vunpack.c.l.b16 %v451
      %v464 = vunpack.c.l.b16 %v452
      %v465 = vpack.c.b16 %v462, %v461
      %v466 = vpack.c.b16 %v464, %v463
      %v470 = vsel %vm237, %v445, 0
      %v473 = vsel %vm237, %v446, 0
      %v476 = vsel %vm237, %v447, 0
      %v479 = vsel %vm237, %v448, 0
      %481 = vmatpush.bf16.msra.mxu0 0
      %482 = vmatpush.bf16.msra.mxu0 0
      %483 = vmatpush.bf16.msra.mxu0 0
      %484 = vmatpush.bf16.msra.mxu0 0
      %485 = vmatpush.bf16.msra.mxu0 0
      %486 = vmatpush.bf16.msra.mxu0 0
      %487 = vmatpush.bf16.msra.mxu0 %v466
      %488 = vmatpush.bf16.msra.mxu0 %v465
      %489 = vmatmul.bf16.gmra.mxu0 %v470
      %v490 = vpop.f32.mrf.mxu0
      %v491 = vadd.f32 %v455, %v490
      %v492 = vpop.f32.mrf.mxu0
      %v493 = vadd.f32 %v455, %v492
      %494 = vmatmul.bf16.gmra.mxu0 %v473
      %v495 = vpop.f32.mrf.mxu0
      %v496 = vadd.f32 %v455, %v495
      %v497 = vpop.f32.mrf.mxu0
      %v498 = vadd.f32 %v455, %v497
      %499 = vmatmul.bf16.gmra.mxu0 %v476
      %v500 = vpop.f32.mrf.mxu0
      %v501 = vadd.f32 %v455, %v500
      %v502 = vpop.f32.mrf.mxu0
      %v503 = vadd.f32 %v455, %v502
      %504 = vmatmul.bf16.gmra.mxu0 %v479
      %v505 = vpop.f32.mrf.mxu0
      %v506 = vadd.f32 %v455, %v505
      %v507 = vpop.f32.mrf.mxu0
      %v508 = vadd.f32 %v455, %v507
      %509 = vdwg.mxu0
      %vm510 = vcmask 523264
      %511 = vst.msk [vmem:[%s226] sm:$0xff] %vm510, %v491
      %512 = vst.msk [vmem:[%s226 + $0x8] sm:$0xff] %vm510, %v493
      %513 = vst.msk [vmem:[%s226 + $0x10] sm:$0xff] %vm510, %v496
      %514 = vst.msk [vmem:[%s226 + $0x18] sm:$0xff] %vm510, %v498
      %515 = vst.msk [vmem:[%s226 + $0x20] sm:$0xff] %vm510, %v501
      %516 = vst.msk [vmem:[%s226 + $0x28] sm:$0xff] %vm510, %v503
      %517 = vst.msk [vmem:[%s226 + $0x30] sm:$0xff] %vm510, %v506
      %518 = vst.msk [vmem:[%s226 + $0x38] sm:$0xff] %vm510, %v508
      %s519 = smul.u32 8, %s16
      %p520 = scmp.lt.s32.totalorder %s519, 15
      %s521 = scalar_select %p520, %s519, 15
      %s522 = smul.addr %s521, 8
      %s523 = scalar_lea.vmem %s5, %s522
      // Predicated region
      $region41: #{tpu_custom_call.1} parent=39 // pred_check
        %p524 = pneg %p144
      $region42: #{tpu_custom_call.1} parent=39 // pred_check_branch
        %526 = sbr.rel (%p524) target = $region44
      $region43: #{tpu_custom_call.1} parent=39 // pred_region
        %s527 = smul.u32 8, %s16
      $region44: #{tpu_custom_call.1} parent=39 // pred_fallthru
        _
    $region40: #{tpu_custom_call.1} parent=5 // pred_fallthru
      _
    %p528 = scmp.le.s32.totalorder 2, %s11
    // Predicated region
    $region45: #{tpu_custom_call.1} parent=5 // pred_check
      %p529 = pneg %p528
    $region46: #{tpu_custom_call.1} parent=5 // pred_check_branch
      %531 = sbr.rel (%p529) target = $region48
    $region47: #{tpu_custom_call.1} parent=5 // pred_region
      %s532 = ssub.s32 %s11, 2
      // Predicated region
      $region49: #{tpu_custom_call.1} parent=47 // pred_check
        %p533 = pneg %p150
      $region50: #{tpu_custom_call.1} parent=47 // pred_check_branch
        %535 = sbr.rel (%p533) target = $region52
      $region51: #{tpu_custom_call.1} parent=47 // pred_region
        %s536 = smul.u32 8, %s17
        %p537 = scmp.lt.s32.totalorder %s536, 15
        %s538 = scalar_select %p537, %s536, 15
        %s539 = smul.addr %s538, 8
        %s540 = scalar_lea.vmem %s5, %s539
      $region52: #{tpu_custom_call.1} parent=47 // pred_fallthru
        _
    $region48: #{tpu_custom_call.1} parent=5 // pred_fallthru
      _
  $region6: #{tpu_custom_call.1} parent=0 // loop_footer
    %s15 = sadd.s32 1, %s11
  $region7: #{tpu_custom_call.1} parent=0 // loop_footer_branch
    %10 = sbr.rel target = $region3
  $region8: #{tpu_custom_call.1} parent=0 // loop_exit
    _

</llo_original>
